<compile_context>
chip_gen: v7x
topology: tpu7x:2x2x1
jax: 0.10.0
libtpu: 0.0.40
codegen_flags: <defaults>
</compile_context>

<pallas_src>
import functools

import jax
import jax.numpy as jnp
from jax.experimental import pallas as pl
from jax.experimental.pallas import tpu as pltpu

NEG = -1e9  # "minus infinity" padding value that stays finite in f32
VMEM_LIMIT = 48 * 1024 * 1024


def _round_up(x, m):
    return ((x + m - 1) // m) * m


# ----------------------------------------------------------------------------
# Kernel 1: dropout + classifier Linear  (the matmul hot path)
# ----------------------------------------------------------------------------
def _classifier_kernel(x_ref, w_ref, b_ref, o_ref):
    acc = jnp.dot(x_ref[...], w_ref[...], preferred_element_type=jnp.float32)
    o_ref[...] = acc + b_ref[...]


def _classifier_dropout_kernel(x_ref, m_ref, w_ref, b_ref, o_ref, *, inv_keep):
    x = x_ref[...] * m_ref[...]                       # bf16 keep-mask {0,1}
    acc = jnp.dot(x, w_ref[...], preferred_element_type=jnp.float32)
    # 1/keep_prob applied on the f32 accumulator (== scaling x pre-matmul)
    o_ref[...] = acc * inv_keep + b_ref[...]


def classifier_forward(x_bf16, keep_mask, w_t, b, keep_prob, apply_dropout,
                       tm=512):
    BS, H = x_bf16.shape
    TP = w_t.shape[1]
    TM = min(tm, _round_up(BS, 16))                   # bf16 sublane packing
    BS_pad = _round_up(BS, TM)
    if BS_pad != BS:
        x_bf16 = jnp.pad(x_bf16, ((0, BS_pad - BS), (0, 0)))
        if apply_dropout:
            keep_mask = jnp.pad(keep_mask, ((0, BS_pad - BS), (0, 0)))

    row_spec = pl.BlockSpec((TM, H), lambda i: (i, 0))
    w_spec = pl.BlockSpec((H, TP), lambda i: (0, 0))
    b_spec = pl.BlockSpec((1, TP), lambda i: (0, 0))

    if apply_dropout:
        kernel = functools.partial(_classifier_dropout_kernel,
                                   inv_keep=1.0 / keep_prob)
        in_specs = [row_spec, row_spec, w_spec, b_spec]
        operands = (x_bf16, keep_mask, w_t, b)
        x_bytes = 2 * BS_pad * H * 2
    else:
        kernel = _classifier_kernel
        in_specs = [row_spec, w_spec, b_spec]
        operands = (x_bf16, w_t, b)
        x_bytes = BS_pad * H * 2

    cost = pl.CostEstimate(
        flops=2 * BS_pad * H * TP,
        transcendentals=0,
        bytes_accessed=x_bytes + H * TP * 2 + TP * 4 + BS_pad * TP * 4)

    out = pl.pallas_call(
        kernel,
        out_shape=jax.ShapeDtypeStruct((BS_pad, TP), jnp.float32),
        grid_spec=pltpu.PrefetchScalarGridSpec(
            num_scalar_prefetch=0,
            grid=(BS_pad // TM,),
            in_specs=in_specs,
            out_specs=pl.BlockSpec((TM, TP), lambda i: (i, 0)),
        ),
        compiler_params=pltpu.CompilerParams(
            dimension_semantics=("parallel",),
            vmem_limit_bytes=VMEM_LIMIT),
        cost_estimate=cost,
    )(*operands)
    return out[:BS]


# ----------------------------------------------------------------------------
# Kernel 2: CRF log-likelihood (torchcrf semantics, batch_first, reduction=sum)
#   Batched over BT sequences per grid step; emissions time-major (S, BT, TP),
#   tag axis on lanes, batch on sublanes.  Loop carry is only
#   (alpha, num, lab_prev, lab_last) — labels are int32 (BT,1); one-hots are
#   rebuilt per step with a single broadcast compare.
# ----------------------------------------------------------------------------
def crf_kernel(em_ref, lab_ref, mask_ref, trans_ref, etr_ref, start_ref,
               end_ref, o_ref):
    S, BT, TP = em_ref.shape
    trans = trans_ref[...]                            # (TP, TP)
    exp_trans = etr_ref[...]                          # (TP, TP), exp(NEG) == 0
    start = start_ref[...]                            # (1, TP)
    end = end_ref[...]                                # (1, TP)

    iota_t = jax.lax.broadcasted_iota(jnp.int32, (BT, TP), 1)

    em0 = em_ref[0]                                   # (BT, TP)
    lab0 = lab_ref[0]                                 # (BT, 1) int32
    oh0 = (lab0 == iota_t).astype(jnp.float32)        # (BT, TP)

    # torchcrf requires mask[:, 0] == 1: position 0 is ungated
    alpha0 = start + em0                              # (BT, TP)
    num0 = jnp.sum(alpha0 * oh0, axis=1, keepdims=True)   # (BT, 1)

    def body(i, carry):
        alpha, num, lab_prev, lab_last = carry
        em_i = em_ref[i]                              # (BT, TP)
        m_i = mask_ref[i]                             # (BT, 1) f32
        lab_i = lab_ref[i]                            # (BT, 1) int32
        oh_prev = (lab_prev == iota_t).astype(jnp.float32)
        oh_i = (lab_i == iota_t).astype(jnp.float32)

        # numerator: trans[tag_{i-1}, tag_i] + em[i, tag_i], gated by mask[i]
        trow = jnp.dot(oh_prev, trans, preferred_element_type=jnp.float32)
        num = num + m_i * jnp.sum((trow + em_i) * oh_i,
                                  axis=1, keepdims=True)

        # denominator: online forward recursion (log partition).  Padded tag
        # columns carry alpha ~ -1e9 and exp_trans == 0, so the 1e-30 guard
        # only ever floors columns that are already at the NEG convention.
        c = jnp.max(alpha, axis=1, keepdims=True)
        nxt = (jnp.log(jnp.dot(jnp.exp(alpha - c), exp_trans,
                               preferred_element_type=jnp.float32) + 1e-30)
               + c + em_i)
        keep = m_i > 0.0
        alpha = jnp.where(keep, nxt, alpha)
        lab_last = jnp.where(keep, lab_i, lab_last)
        return alpha, num, lab_i, lab_last

    alpha, num, _, lab_last = jax.lax.fori_loop(
        1, S, body, (alpha0, num0, lab0, lab0), unroll=2)

    oh_last = (lab_last == iota_t).astype(jnp.float32)
    numerator = num + jnp.sum(oh_last * end, axis=1, keepdims=True)
    final = alpha + end
    c = jnp.max(final, axis=1, keepdims=True)
    denom = jnp.log(jnp.sum(jnp.exp(final - c), axis=1, keepdims=True)) + c

    # lane-dense store: broadcast the (BT,1) log-likelihood across 128 lanes
    o_ref[...] = jnp.broadcast_to(numerator - denom, (BT, TP))


def crf_log_likelihood(em_t, lab_t, mask_t, trans, exp_trans, start, end,
                       bt=32):
    S, B, TP = em_t.shape
    BT = min(bt, _round_up(B, 8))
    Bp = _round_up(B, BT)
    if Bp != B:
        pad = ((0, 0), (0, Bp - B), (0, 0))
        em_t = jnp.pad(em_t, pad)
        lab_t = jnp.pad(lab_t, pad)
        mask_t = jnp.pad(mask_t, pad)

    out = pl.pallas_call(
        crf_kernel,
        out_shape=jax.ShapeDtypeStruct((Bp, TP), jnp.float32),
        grid_spec=pltpu.PrefetchScalarGridSpec(
            num_scalar_prefetch=0,
            grid=(Bp // BT,),
            in_specs=[
                pl.BlockSpec((S, BT, TP), lambda g: (0, g, 0)),
                pl.BlockSpec((S, BT, 1), lambda g: (0, g, 0)),
                pl.BlockSpec((S, BT, 1), lambda g: (0, g, 0)),
                pl.BlockSpec((TP, TP), lambda g: (0, 0)),
                pl.BlockSpec((TP, TP), lambda g: (0, 0)),
                pl.BlockSpec((1, TP), lambda g: (0, 0)),
                pl.BlockSpec((1, TP), lambda g: (0, 0)),
            ],
            out_specs=pl.BlockSpec((BT, TP), lambda g: (g, 0)),
        ),
        compiler_params=pltpu.CompilerParams(
            dimension_semantics=("parallel",),
            vmem_limit_bytes=VMEM_LIMIT),
    )(em_t, lab_t, mask_t, trans, exp_trans, start, end)
    return out[:B, 0]


# ----------------------------------------------------------------------------
# Model wrapper (parameter setup + glue reshapes in plain JAX)
# ----------------------------------------------------------------------------
class ModelForTokenClassificationPallas:
    def __init__(self, vocab_size, hidden_size, num_tags, dropout=0.1, seed=0):
        key = jax.random.PRNGKey(seed)
        k_emb, k_w, k_b, k_st, k_en, k_tr = jax.random.split(key, 6)
        self.hidden_size = hidden_size
        self.num_tags = num_tags
        self.TP = 128                  # tag axis padded to one full lane dim
        self.dropout_p = float(dropout)

        # TODO(synk): the real encoder (FlavaModel / FlavaTextModel) is an
        # external injected module; stubbed with a frozen bf16 embedding lookup.
        self.embedding = (jax.random.normal(
            k_emb, (vocab_size, hidden_size), jnp.float32) * 0.02
            ).astype(jnp.bfloat16)

        # classifier = nn.Linear(hidden_size, num_tags):
        #   weight stored transposed, lane-padded, bf16 for the MXU
        bound = 1.0 / jnp.sqrt(jnp.float32(hidden_size))
        w = jax.random.uniform(k_w, (num_tags, hidden_size), jnp.float32,
                               -bound, bound)
        b = jax.random.uniform(k_b, (num_tags,), jnp.float32, -bound, bound)
        self.w_t = (jnp.zeros((hidden_size, self.TP), jnp.bfloat16)
                    .at[:, :num_tags].set(w.T.astype(jnp.bfloat16)))
        self.b = jnp.full((1, self.TP), NEG,
                          jnp.float32).at[0, :num_tags].set(b)

        # CRF params (torchcrf init: uniform(-0.1, 0.1)), lane-padded with NEG
        st = jax.random.uniform(k_st, (num_tags,), jnp.float32, -0.1, 0.1)
        en = jax.random.uniform(k_en, (num_tags,), jnp.float32, -0.1, 0.1)
        tr = jax.random.uniform(k_tr, (num_tags, num_tags), jnp.float32,
                                -0.1, 0.1)
        self.start = jnp.full((1, self.TP), NEG,
                              jnp.float32).at[0, :num_tags].set(st)
        self.end = jnp.full((1, self.TP), NEG,
                            jnp.float32).at[0, :num_tags].set(en)
        self.trans = jnp.full((self.TP, self.TP), NEG,
                              jnp.float32).at[:num_tags, :num_tags].set(tr)
        # hoisted out of the CRF kernel (padded rows/cols -> exactly 0)
        self.exp_trans = jnp.exp(self.trans)

    def __call__(self, inputs, labels=None, *, training=True, dropout_key=None):
        input_ids = inputs["input_ids"]
        attention_mask = inputs["attention_mask"]
        B, S = input_ids.shape
        H, TP, T = self.hidden_size, self.TP, self.num_tags

        # frozen encoder stub: gather in TIME-MAJOR order so the classifier
        # output reshapes to the CRF layout for free (no padded-slab transpose)
        hidden_t = self.embedding[input_ids.T]             # (S, B, H) bf16
        x = hidden_t.reshape(S * B, H)                     # row = s*B + b

        apply_dropout = bool(training and self.dropout_p > 0.0)
        keep_prob = 1.0 - self.dropout_p
        if apply_dropout:
            if dropout_key is None:
                dropout_key = jax.random.PRNGKey(0)
            # TODO(synk): host-side mask because pltpu.prng_* has no
            # interpret/CPU lowering; on hardware an in-kernel PRNG mask would
            # remove this bf16 stream over HBM.
            keep_mask = jax.random.bernoulli(
                dropout_key, keep_prob, (S * B, H)).astype(jnp.bfloat16)
        else:
            keep_mask = None

        logits_pad = classifier_forward(
            x, keep_mask, self.w_t, self.b, keep_prob, apply_dropout)
        em_t = logits_pad.reshape(S, B, TP)                # time-major, free
        logits = jnp.transpose(em_t[:, :, :T], (1, 0, 2))  # (B, S, T), small

        loss = None
        if labels is not None:
            # NOTE: torchcrf requires mask[:, 0] == 1 (assumed here as well)
            lab_t = jnp.transpose(labels.astype(jnp.int32), (1, 0))[:, :, None]
            mask_t = jnp.transpose(
                attention_mask.astype(jnp.float32), (1, 0))[:, :, None]
            llh = crf_log_likelihood(em_t, lab_t, mask_t, self.trans,
                                     self.exp_trans, self.start, self.end)
            loss = -jnp.sum(llh)       # torchcrf reduction='sum', then negated
        return logits, loss


if __name__ == "__main__":
    B, S, H, T, V = 2, 8, 32, 5, 50
    key = jax.random.PRNGKey(0)
    k_ids, k_lab, k_drop = jax.random.split(key, 3)

    input_ids = jax.random.randint(k_ids, (B, S), 0, V)
    lengths = jnp.array([8, 6], dtype=jnp.int32)
    attention_mask = (jnp.arange(S)[None, :] < lengths[:, None]).astype(jnp.int32)
    labels = jax.random.randint(k_lab, (B, S), 0, T)

    model = ModelForTokenClassificationPallas(V, H, T, dropout=0.1, seed=0)
    inputs = {"input_ids": input_ids, "attention_mask": attention_mask}

    logits, loss = model(inputs, labels=labels, training=True,
                         dropout_key=k_drop)
    jax.block_until_ready((logits, loss))
    print("KERNEL_OK")
</pallas_src>

<mosaic_0001>
module attributes {stable_mosaic.version = 11 : i64} {
  func.func @_classifier_dropout_kernel(%arg0: i32, %arg1: memref<16x32xbf16, #tpu.memory_space<vmem>>, %arg2: memref<16x32xbf16, #tpu.memory_space<vmem>>, %arg3: memref<32x128xbf16, #tpu.memory_space<vmem>>, %arg4: memref<1x128xf32, #tpu.memory_space<vmem>>, %arg5: memref<16x128xf32, #tpu.memory_space<vmem>>) attributes {dimension_semantics = [#tpu.dimension_semantics<parallel>], iteration_bounds = array<i64: 1>, scalar_prefetch = 0 : i64, scratch_operands = 0 : i64, tpu.core_type = #tpu.core_type<tc>, window_params = [{transform_indices = @transform_0, window_bounds = array<i64: 16, 32>}, {transform_indices = @transform_1, window_bounds = array<i64: 16, 32>}, {pipeline_mode = #tpu.pipeline_mode<synchronous>, transform_indices = @transform_2, window_bounds = array<i64: 32, 128>}, {pipeline_mode = #tpu.pipeline_mode<synchronous>, transform_indices = @transform_3, window_bounds = array<i64: 1, 128>}, {transform_indices = @transform_4, window_bounds = array<i64: 16, 128>}]} {
    %c0 = arith.constant 0 : index
    %c0_0 = arith.constant 0 : index
    %0 = vector.load %arg1[%c0, %c0_0] : memref<16x32xbf16, #tpu.memory_space<vmem>>, vector<16x32xbf16>
    %c0_1 = arith.constant 0 : index
    %c0_2 = arith.constant 0 : index
    %1 = vector.load %arg2[%c0_1, %c0_2] : memref<16x32xbf16, #tpu.memory_space<vmem>>, vector<16x32xbf16>
    %2 = arith.mulf %0, %1 : vector<16x32xbf16>
    %c0_3 = arith.constant 0 : index
    %c0_4 = arith.constant 0 : index
    %3 = vector.load %arg3[%c0_3, %c0_4] : memref<32x128xbf16, #tpu.memory_space<vmem>>, vector<32x128xbf16>
    %cst = arith.constant dense<0.000000e+00> : vector<16x128xf32>
    %4 = tpu.matmul %2, %3, %cst {dimension_numbers = #tpu.dot_dimension_numbers<[1], [0], [0], [1], [0, 0, 1, 1], [], []>} : vector<16x32xbf16>, vector<32x128xbf16>, vector<16x128xf32> -> vector<16x128xf32>
    %cst_5 = arith.constant 1.11111116 : f32
    %5 = vector.broadcast %cst_5 : f32 to vector<16x128xf32>
    %6 = arith.mulf %4, %5 : vector<16x128xf32>
    %c0_6 = arith.constant 0 : index
    %c0_7 = arith.constant 0 : index
    %7 = vector.load %arg4[%c0_6, %c0_7] : memref<1x128xf32, #tpu.memory_space<vmem>>, vector<1x128xf32>
    %8 = vector.broadcast %7 : vector<1x128xf32> to vector<16x128xf32>
    %9 = arith.addf %6, %8 : vector<16x128xf32>
    %c0_8 = arith.constant 0 : index
    %c0_9 = arith.constant 0 : index
    %10 = vector.load %arg5[%c0_8, %c0_9] : memref<16x128xf32, #tpu.memory_space<vmem>>, vector<16x128xf32>
    tpu.vector_store %arg5[%c0_8, %c0_9], %9 {strides = array<i32>} : memref<16x128xf32, #tpu.memory_space<vmem>>, vector<16x128xf32>,
    return
  }
  func.func @transform_0(%arg0: i32) -> (i32, i32) {
    %c0_i32 = arith.constant 0 : i32
    %c0_i32_0 = arith.constant 0 : i32
    return %arg0, %c0_i32 : i32, i32
  }
  func.func @transform_1(%arg0: i32) -> (i32, i32) {
    %c0_i32 = arith.constant 0 : i32
    %c0_i32_0 = arith.constant 0 : i32
    return %arg0, %c0_i32 : i32, i32
  }
  func.func @transform_2(%arg0: i32) -> (i32, i32) {
    %c0_i32 = arith.constant 0 : i32
    %c0_i32_0 = arith.constant 0 : i32
    %c0_i32_1 = arith.constant 0 : i32
    return %c0_i32, %c0_i32_0 : i32, i32
  }
  func.func @transform_3(%arg0: i32) -> (i32, i32) {
    %c0_i32 = arith.constant 0 : i32
    %c0_i32_0 = arith.constant 0 : i32
    %c0_i32_1 = arith.constant 0 : i32
    return %c0_i32, %c0_i32_0 : i32, i32
  }
  func.func @transform_4(%arg0: i32) -> (i32, i32) {
    %c0_i32 = arith.constant 0 : i32
    %c0_i32_0 = arith.constant 0 : i32
    return %arg0, %c0_i32 : i32, i32
  }
}

</mosaic_0001>

<llo_original>
// kernel: tpu_custom_call.1
$region0: #{tpu_custom_call.1}
  #allocation0 [shape = 'u32[]', space=smem, size = 0x4, offset = 0x4, fixed_abs, tag = 'smem constant byte address 0x4 - core index']
  #allocation1 [shape = 'u32[144,128]{1,0:T(1,128)}', space=vmem, size = 0x12000, scoped, tag = 'internal scratch']
  %s0 = inlined_call_operand.hbm [shape: bf16[16,32], index: 0, kind: input, shape index: {}]
  %s1 = inlined_call_operand.hbm [shape: bf16[16,32], index: 1, kind: input, shape index: {}]
  %s2 = inlined_call_operand.hbm [shape: bf16[32,128], index: 2, kind: input, shape index: {}]
  %s3 = inlined_call_operand.vmem [shape: f32[1,128], index: 3, kind: input, shape index: {}]
  %s4 = inlined_call_operand.hbm [shape: f32[16,128], index: 4, kind: output, shape index: {}]
  %s5 = sld [smem:[#allocation0]]
  $region38: #{tpu_custom_call.1} parent=0
    _
  %s7 = ssub.s32 1, %s5
  %s8 = scalar_select 0, %s7, %s5
  $region1: #{tpu_custom_call.1} parent=0
    #allocation2 [shape = 'u8[4096]{0}', space=vmem, size = 0x1000, scoped, tag = 'input window, operand 0, single buffered']
    #allocation3 [shape = 's32[1]{0}', space=sflag, size = 0x4, scoped, tag = 'scoped memory for tpu_custom_call.1']
    #allocation4 [shape = 's32[1]{0}', space=sflag, size = 0x4, scoped, tag = 'scoped memory for tpu_custom_call.1']
    #allocation5 [shape = 'u8[4096]{0}', space=vmem, size = 0x1000, scoped, tag = 'input window, operand 1, single buffered']
    #allocation6 [shape = 's32[1]{0}', space=sflag, size = 0x4, scoped, tag = 'scoped memory for tpu_custom_call.1']
    #allocation7 [shape = 'u8[8192]{0}', space=vmem, size = 0x2000, scoped, tag = 'input window, operand 2, single buffered']
    #allocation8 [shape = 'u8[8192]{0}', space=vmem, size = 0x2000, scoped, tag = 'output window, operand 0, single buffered']
    %9 = vsyncpa [#allocation3], 0
    %10 = vsyncpa [#allocation6], 0
    %11 = vsyncpa [#allocation4], 0
    // Predicated region
    $region2: #{tpu_custom_call.1} parent=1 // pred_check
      _
    $region3: #{tpu_custom_call.1} parent=1 // pred_check_branch
      %13 = sbr.rel (0) target = $region5
    $region4: #{tpu_custom_call.1} parent=1 // pred_region
      %s15 = ssub.s32 128, 128
      %16 = vsyncadd [#allocation3], %s15
      %s17 = sshll.u32 [#allocation2], 4
      %s18 = int_to_ptr.vmem [resolvable:$true] %s17
      %23 = dma.hbm_to_vmem [thread:$0]  %s0, 128, %s18, [#allocation3], 64, 64, 4
    $region5: #{tpu_custom_call.1} parent=1 // pred_fallthru
      _
    // Predicated region
    $region6: #{tpu_custom_call.1} parent=1 // pred_check
      _
    $region7: #{tpu_custom_call.1} parent=1 // pred_check_branch
      %25 = sbr.rel (0) target = $region9
    $region8: #{tpu_custom_call.1} parent=1 // pred_region
      %s27 = ssub.s32 128, 128
      %28 = vsyncadd [#allocation6], %s27
      %s29 = sshll.u32 [#allocation5], 4
      %s30 = int_to_ptr.vmem [resolvable:$true] %s29
      %35 = dma.hbm_to_vmem [thread:$0]  %s1, 128, %s30, [#allocation6], 64, 64, 4
    $region9: #{tpu_custom_call.1} parent=1 // pred_fallthru
      _
    // Predicated region
    $region10: #{tpu_custom_call.1} parent=1 // pred_check
      _
    $region11: #{tpu_custom_call.1} parent=1 // pred_check_branch
      %37 = sbr.rel (0) target = $region13
    $region12: #{tpu_custom_call.1} parent=1 // pred_region
      %s39 = ssub.s32 256, 256
      %40 = vsyncadd [#allocation6], %s39
      %s41 = sshll.u32 [#allocation7], 4
      %s42 = int_to_ptr.vmem [resolvable:$true] %s41
      %47 = dma.hbm_to_vmem [thread:$0]  %s2, 256, %s42, [#allocation6], 64, 64, 4
    $region13: #{tpu_custom_call.1} parent=1 // pred_fallthru
      _
    // Predicated region
    $region14: #{tpu_custom_call.1} parent=1 // pred_check
      _
    $region15: #{tpu_custom_call.1} parent=1 // pred_check_branch
      %49 = sbr.rel (0) target = $region17
    $region16: #{tpu_custom_call.1} parent=1 // pred_region
      _
    $region17: #{tpu_custom_call.1} parent=1 // pred_fallthru
      _
    // Predicated region
    $region18: #{tpu_custom_call.1} parent=1 // pred_check
      _
    $region19: #{tpu_custom_call.1} parent=1 // pred_check_branch
      %51 = sbr.rel (0) target = $region21
    $region20: #{tpu_custom_call.1} parent=1 // pred_region
      %52 = dma.done [#allocation3], 128
    $region21: #{tpu_custom_call.1} parent=1 // pred_fallthru
      _
    // Predicated region
    $region22: #{tpu_custom_call.1} parent=1 // pred_check
      _
    $region23: #{tpu_custom_call.1} parent=1 // pred_check_branch
      %54 = sbr.rel (0) target = $region25
    $region24: #{tpu_custom_call.1} parent=1 // pred_region
      %55 = dma.done [#allocation6], 128
    $region25: #{tpu_custom_call.1} parent=1 // pred_fallthru
      _
    // Predicated region
    $region26: #{tpu_custom_call.1} parent=1 // pred_check
      _
    $region27: #{tpu_custom_call.1} parent=1 // pred_check_branch
      %57 = sbr.rel (0) target = $region29
    $region28: #{tpu_custom_call.1} parent=1 // pred_region
      %58 = dma.done [#allocation6], 256
    $region29: #{tpu_custom_call.1} parent=1 // pred_fallthru
      _
    %v60 = vld [vmem:[#allocation2] sm:$0xf]
    %v61 = vld [vmem:[#allocation2 + $0x4] sm:$0xf]
    %v62 = vld [vmem:[#allocation5] sm:$0xf]
    %v63 = vld [vmem:[#allocation5 + $0x4] sm:$0xf]
    %v64 = vmul.bf16 %v60, %v62
    %v65 = vmul.bf16 %v61, %v63
    %v66 = vld [vmem:[#allocation7] sm:$0xf]
    %v67 = vld [vmem:[#allocation7 + $0x4] sm:$0xf]
    %v68 = vld [vmem:[#allocation7 + $0x8] sm:$0xf]
    %v69 = vld [vmem:[#allocation7 + $0xc] sm:$0xf]
    %v72 = vunpack.c.l.b16 %v64
    %v73 = vunpack.c.l.b16 %v65
    %v74 = vpack.c.b16 %v73, %v72
    %v79 = vunpack.c.l.b16 %v66
    %v80 = vunpack.c.l.b16 %v67
    %v81 = vunpack.c.l.b16 %v68
    %v82 = vunpack.c.l.b16 %v69
    %v83 = vpack.c.b16 %v80, %v79
    %v84 = vpack.c.b16 %v82, %v81
    %vm87 = vcmask 261120
    %v89 = vsel %vm87, %v74, 0
    %91 = vmatprep.subr.bf16.mxu0 0
    %92 = vmatpush1.bf16.msra.mxu0 %v83
    %93 = vmatprep.subr.bf16.mxu0 0
    %94 = vmatpush1.bf16.msra.mxu0 %v84
    %95 = vmatprep.subr.bf16.mxu0 0
    %96 = vmatpush1.bf16.msra.mxu0 0
    %97 = vmatprep.subr.bf16.mxu0 0
    %98 = vmatpush1.bf16.msra.mxu0 0
    %99 = vmatprep.subr.bf16.mxu0 0
    %100 = vmatpush1.bf16.msra.mxu0 0
    %101 = vmatprep.subr.bf16.mxu0 0
    %102 = vmatpush1.bf16.msra.mxu0 0
    %103 = vmatprep.subr.bf16.mxu0 0
    %104 = vmatpush1.bf16.msra.mxu0 0
    %105 = vmatprep.subr.bf16.mxu0 0
    %106 = vmatpush1.bf16.msra.mxu0 0
    %107 = vmatprep.subr.bf16.mxu0 0
    %108 = vmatpush1.bf16.msra.mxu0 0
    %109 = vmatprep.subr.bf16.mxu0 0
    %110 = vmatpush1.bf16.msra.mxu0 0
    %111 = vmatprep.subr.bf16.mxu0 0
    %112 = vmatpush1.bf16.msra.mxu0 0
    %113 = vmatprep.subr.bf16.mxu0 0
    %114 = vmatpush1.bf16.msra.mxu0 0
    %115 = vmatprep.subr.bf16.mxu0 0
    %116 = vmatpush1.bf16.msra.mxu0 0
    %117 = vmatprep.subr.bf16.mxu0 0
    %118 = vmatpush1.bf16.msra.mxu0 0
    %119 = vmatprep.subr.bf16.mxu0 0
    %120 = vmatpush1.bf16.msra.mxu0 0
    %121 = vmatprep.subr.bf16.mxu0 0
    %122 = vmatpush1.bf16.msra.mxu0 0
    %123 = vmatprep.mubr.bf16.mxu0 0
    %124 = vmatmul.mubr.bf16.gmra.mrb[0].mxu0 %v89
    %v125 = vpop.f32.mrb[0].mxu0
    %v126 = vadd.f32 0.0, %v125
    %v127 = vpop.f32.mrb[0].mxu0
    %v128 = vpop.f32.mrb[0].mxu0
    %v129 = vadd.f32 0.0, %v128
    %v130 = vpop.f32.mrb[0].mxu0
    %131 = vdwg.mxu0
    %v132 = vmul.f32 %v126, 1.1111112
    %v133 = vmul.f32 %v129, 1.1111112
    %v134 = vld [vmem:[%s3] sm:$0x1]
    %v136 = vlaneseq
    %v137 = vshrl.u32 %v136, 7
    %v138 = vsub.s32 0, %v137
    %v139 = vrot.slane %v134, %v138
    %v141 = vadd.f32 %v132, %v139
    %v142 = vadd.f32 %v133, %v139
    %143 = vst [vmem:[#allocation8] sm:$0xff] %v141
    %144 = vst [vmem:[#allocation8 + $0x8] sm:$0xff] %v142
    // Predicated region
    $region30: #{tpu_custom_call.1} parent=1 // pred_check
      _
    $region31: #{tpu_custom_call.1} parent=1 // pred_check_branch
      %146 = sbr.rel (0) target = $region33
    $region32: #{tpu_custom_call.1} parent=1 // pred_region
      %s148 = ssub.s32 256, 256
      %149 = vsyncadd [#allocation4], %s148
      %s150 = sshll.u32 [#allocation8], 4
      %s151 = int_to_ptr.vmem [resolvable:$true] %s150
      %156 = dma.vmem_to_hbm [thread:$0]  %s151, 256, %s4, [#allocation4], 128, 128, 8
    $region33: #{tpu_custom_call.1} parent=1 // pred_fallthru
      _
    // Predicated region
    $region34: #{tpu_custom_call.1} parent=1 // pred_check
      _
    $region35: #{tpu_custom_call.1} parent=1 // pred_check_branch
      %158 = sbr.rel (0) target = $region37
    $region36: #{tpu_custom_call.1} parent=1 // pred_region
      %159 = dma.done [#allocation4], 256
    $region37: #{tpu_custom_call.1} parent=1 // pred_fallthru
      _
    %160 = vsyncpa [#allocation3], 1
    %161 = vsyncpa [#allocation6], 1
    %162 = vsyncpa [#allocation4], 1

</llo_original>
